<compile_context>
chip_gen: v5e
topology: v5e:2x2
jax: 0.10.0
libtpu: 0.0.40
codegen_flags: <defaults>
</compile_context>

<pallas_src>
import functools
from math import sqrt

import jax
import jax.numpy as jnp
from jax import lax
from jax.experimental import pallas as pl
from jax.experimental.pallas import tpu as pltpu


# Conservative cross-generation scoped-VMEM limit: above the 16/32 MiB scoped
# defaults (v5e / v6e-v7x) so larger row tiles compile, below v7x's 64 MiB
# physical capacity.
_VMEM_LIMIT_BYTES = 48 * 1024 * 1024


# ------------------------- fused QKV projection ----------------------------

def _qkv_kernel(x_ref, w_ref, b_ref, q_ref, k_ref, v_ref, *, dim_k, mxu_dtype):
    # x_ref: (tm, D); w_ref: (D, 2*dim_k + dim_v) already stored in mxu_dtype;
    # b_ref: (1, 2*dim_k + dim_v) f32.  One wide MXU matmul; the f32 result is
    # split along lanes into the three separate Q/K/V outputs so the wrapper
    # never column-slices a concatenated array (no strided inter-kernel copies).
    x = x_ref[...].astype(mxu_dtype)
    y = jnp.dot(x, w_ref[...], preferred_element_type=jnp.float32) + b_ref[...]
    # Bias is added exactly once per output tile (there is no K grid axis).
    # TODO(synk): for large input_dim add a K ("arbitrary") grid axis with an
    # f32 VMEM accumulator and move the bias add into the finalize step.
    q_ref[...] = y[:, :dim_k].astype(q_ref.dtype)
    k_ref[...] = y[:, dim_k:2 * dim_k].astype(k_ref.dtype)
    v_ref[...] = y[:, 2 * dim_k:].astype(v_ref.dtype)


def _pick_row_tile(M, pref=512):
    """Largest row tile <= pref that divides M, preferring >= 2 grid steps so
    both v7x TensorCores get work (v5e/v6e are single-TC, unaffected)."""
    tiles = (1024, 512, 256, 128, 64, 32, 16, 8)
    for t in tiles:
        if t <= pref and M % t == 0 and M // t >= 2:
            return t
    for t in tiles:
        if t <= pref and M % t == 0:
            return t
    # TODO(synk): pad M (or use a masked tail block) for awkward factors instead
    # of requesting a full-M block that could exceed VMEM.
    return M


def pallas_qkv_projection(x2d, w_qkv, b_qkv, dim_k, dim_v, *,
                          mxu_dtype=jnp.float32, out_dtype=jnp.float32):
    """(Q, K, V) = split(x2d @ W_qkv + b_qkv), emitted as three separate outputs.

    x2d: (M, D) f32; w_qkv: (D, 2*dim_k+dim_v) pre-cast to mxu_dtype;
    b_qkv: (2*dim_k+dim_v,) f32.
    """
    M, D = x2d.shape
    N = w_qkv.shape[1]
    tm = _pick_row_tile(M)
    kernel = functools.partial(_qkv_kernel, dim_k=dim_k, mxu_dtype=mxu_dtype)
    # TODO(synk): on v5e, tile N and/or use pipeline_mode=pl.Buffered(1) on the
    # constant-index weight/bias specs to halve their resident VMEM footprint.
    return pl.pallas_call(
        kernel,
        out_shape=(
            jax.ShapeDtypeStruct((M, dim_k), out_dtype),
            jax.ShapeDtypeStruct((M, dim_k), out_dtype),
            jax.ShapeDtypeStruct((M, dim_v), out_dtype),
        ),
        grid=(M // tm,),
        in_specs=[
            pl.BlockSpec((tm, D), lambda i: (i, 0)),   # stream rows of x
            pl.BlockSpec((D, N), lambda i: (0, 0)),    # weights resident (pre-cast)
            pl.BlockSpec((1, N), lambda i: (0, 0)),    # bias resident
        ],
        out_specs=(
            pl.BlockSpec((tm, dim_k), lambda i: (i, 0)),
            pl.BlockSpec((tm, dim_k), lambda i: (i, 0)),
            pl.BlockSpec((tm, dim_v), lambda i: (i, 0)),
        ),
        compiler_params=pltpu.CompilerParams(
            dimension_semantics=("parallel",),
            vmem_limit_bytes=_VMEM_LIMIT_BYTES),
    )(x2d, w_qkv, b_qkv.reshape(1, N))


# ------------------------------- attention ----------------------------------

def _attention_kernel(q_ref, k_ref, v_ref, o_ref, *, mxu_dtype, newton):
    # q_ref/k_ref: (G, S, dk), v_ref: (G, S, dv) -> o_ref: (1, S, G*dv).
    # The G (head,batch) slices are folded into the lane axis so the final
    # store is one lane-dense slab (avoids masked vst.msk when dv < 128).
    q = q_ref[...].astype(mxu_dtype)
    k = k_ref[...].astype(mxu_dtype)
    v = v_ref[...].astype(mxu_dtype)
    G, S, dv = v_ref.shape

    # Batched scores, contracting d_k directly (no explicit k.T / XLU xpose).
    # NOTE: no 1/sqrt(dim_k) scaling — the PyTorch forward never applies it.
    s = lax.dot_general(
        q, k,
        dimension_numbers=(((2,), (2,)), ((0,), (0,))),
        preferred_element_type=jnp.float32,
    )                                                       # (G, S, S) f32

    # Numerically-stable softmax, statistics kept in f32.
    m = jnp.max(s, axis=-1, keepdims=True)
    p = jnp.exp(s - m)
    denom = jnp.sum(p, axis=-1, keepdims=True)
    inv = pl.reciprocal(denom, approx=True)                 # EUP vrcp (free slot)
    if newton:                                              # only for f32 output
        inv = inv * (2.0 - denom * inv)                     # 1 Newton step

    o = lax.dot_general(
        p.astype(mxu_dtype), v,
        dimension_numbers=(((2,), (1,)), ((0,), (0,))),
        preferred_element_type=jnp.float32,
    )                                                       # (G, S, dv) f32
    o = o * inv

    # Lane-dense output slab: (G, S, dv) -> (S, G*dv), single unmasked store.
    slab = jnp.concatenate([o[g] for g in range(G)], axis=-1)
    o_ref[0] = slab.astype(o_ref.dtype)


def _pick_group(HB, S):
    """(head,batch) slices per grid step.  Fill sublanes / amortize the ~0.35us
    grid-step cost, but cap so the live (G,S,S) f32 score+exp blocks stay well
    inside VMEM (v7x: 64 MiB) and prefer >= 2 grid steps (v7x has 2 TCs)."""
    score_bytes = 2 * S * S * 4                 # s + p per (head,batch) slice
    cap = max(1, (24 * 1024 * 1024) // score_bytes)
    target = max(1, min(cap, HB // 2 if HB >= 2 else 1))
    for g in range(target, 0, -1):
        if HB % g == 0:
            return g
    return 1


def pallas_attention(q, k, v, *, mxu_dtype=jnp.float32, out_dtype=jnp.float32):
    """softmax(Q @ K^T) @ V, batched over the leading (head*batch) axis.
    q, k: (HB, S, dk), v: (HB, S, dv) -> (HB, S, dv)."""
    HB, S, dk = q.shape
    dv = v.shape[-1]
    G = _pick_group(HB, S)
    newton = jnp.dtype(out_dtype) == jnp.dtype(jnp.float32)
    out = pl.pallas_call(
        functools.partial(_attention_kernel, mxu_dtype=mxu_dtype, newton=newton),
        out_shape=jax.ShapeDtypeStruct((HB // G, S, G * dv), out_dtype),
        grid=(HB // G,),
        in_specs=[
            pl.BlockSpec((G, S, dk), lambda i: (i, 0, 0)),
            pl.BlockSpec((G, S, dk), lambda i: (i, 0, 0)),
            pl.BlockSpec((G, S, dv), lambda i: (i, 0, 0)),
        ],
        out_specs=pl.BlockSpec((1, S, G * dv), lambda i: (i, 0, 0)),
        compiler_params=pltpu.CompilerParams(
            dimension_semantics=("parallel",),
            vmem_limit_bytes=_VMEM_LIMIT_BYTES),
    )(q, k, v)
    # TODO(synk): for S >= ~1024 tile the KV axis (flash-style online softmax,
    # "arbitrary" KV grid axis + VMEM accumulator) so the (S,S) score block
    # fits v7x's 64 MiB VMEM instead of growing with S^2.
    # Undo the lane-dense packing: (HB//G, S, G, dv) -> (HB, S, dv).
    return out.reshape(HB // G, S, G, dv).transpose(0, 2, 1, 3).reshape(HB, S, dv)


# ------------------------------ Module wrapper ------------------------------

class SelfAttentionMultiHead:
    def __init__(self, input_dim, dim_k, dim_v, nums_head, key,
                 mxu_dtype=jnp.float32):
        assert dim_k % nums_head == 0
        assert dim_v % nums_head == 0
        self.input_dim = input_dim
        self.dim_k = dim_k
        self.dim_v = dim_v
        self.nums_head = nums_head
        self._norm_fact = 1.0 / sqrt(dim_k)  # defined (like PyTorch) but unused
        # bf16 recommended on v6e/v7x at production scale (f32 accumulate);
        # f32 here keeps the 1e-5 reference tolerance of the demo.
        self.mxu_dtype = mxu_dtype
        self.act_dtype = mxu_dtype           # Q/K/V storage dtype between kernels

        # Deterministic init, mimicking nn.Linear's U(-1/sqrt(in), 1/sqrt(in)).
        bound = 1.0 / sqrt(input_dim)
        ks = jax.random.split(key, 6)
        # f32 master weights stored as (in, out) so that y = x @ W + b.
        self.wq = jax.random.uniform(ks[0], (input_dim, dim_k), jnp.float32, -bound, bound)
        self.bq = jax.random.uniform(ks[1], (dim_k,), jnp.float32, -bound, bound)
        self.wk = jax.random.uniform(ks[2], (input_dim, dim_k), jnp.float32, -bound, bound)
        self.bk = jax.random.uniform(ks[3], (dim_k,), jnp.float32, -bound, bound)
        self.wv = jax.random.uniform(ks[4], (input_dim, dim_v), jnp.float32, -bound, bound)
        self.bv = jax.random.uniform(ks[5], (dim_v,), jnp.float32, -bound, bound)

        # Fused QKV parameters, pre-cast ONCE to the MXU dtype (no per-step
        # in-kernel weight casts, half the resident VMEM when bf16).  Bias stays
        # f32 because it is added after the f32 matmul accumulation.
        self.w_qkv = jnp.concatenate([self.wq, self.wk, self.wv], axis=1).astype(mxu_dtype)
        self.b_qkv = jnp.concatenate([self.bq, self.bk, self.bv], axis=0)

    def __call__(self, x):
        B, S, D = x.shape
        H = self.nums_head
        dk_h = self.dim_k // H
        dv_h = self.dim_v // H

        x2d = x.reshape(B * S, D)
        Q, K, V = pallas_qkv_projection(
            x2d, self.w_qkv, self.b_qkv, self.dim_k, self.dim_v,
            mxu_dtype=self.mxu_dtype, out_dtype=self.act_dtype)

        # Exact PyTorch reshape: (B, S, dim) --flat--> (H, B, S, dim//H),
        # then flatten (H, B) for the batched attention grid.
        Qh = Q.reshape(H * B, S, dk_h)
        Kh = K.reshape(H * B, S, dk_h)
        Vh = V.reshape(H * B, S, dv_h)

        out = pallas_attention(Qh, Kh, Vh, mxu_dtype=self.mxu_dtype,
                               out_dtype=jnp.float32)       # (H*B, S, dv_h)

        # Exact PyTorch final reshape: (H, B, S, dv_h) --flat--> (B, S, dim_v)
        return out.reshape(B, S, self.dim_v)


# ------------------------------ Reference (JAX) -----------------------------

def reference_forward(x, mod: SelfAttentionMultiHead):
    B, S, _ = x.shape
    H = mod.nums_head
    Q = (x @ mod.wq + mod.bq).reshape(H, B, S, mod.dim_k // H)
    K = (x @ mod.wk + mod.bk).reshape(H, B, S, mod.dim_k // H)
    V = (x @ mod.wv + mod.bv).reshape(H, B, S, mod.dim_v // H)
    s = jnp.einsum("hbqd,hbkd->hbqk", Q, K)
    a = jax.nn.softmax(s, axis=-1)
    o = jnp.einsum("hbqk,hbkd->hbqd", a, V)
    return o.reshape(B, S, mod.dim_v)


# ---------------------------------- Main ------------------------------------

if __name__ == "__main__":
    B, S, input_dim = 2, 8, 32
    dim_k, dim_v, nums_head = 32, 32, 4

    key = jax.random.PRNGKey(0)
    k_params, k_x = jax.random.split(key)

    mod = SelfAttentionMultiHead(input_dim, dim_k, dim_v, nums_head, k_params)
    x = jax.random.normal(k_x, (B, S, input_dim), dtype=jnp.float32)

    out = mod(x)
    out = jax.block_until_ready(out)

    ref = reference_forward(x, mod)
    assert out.shape == (B, S, dim_v)
    assert jnp.allclose(out, ref, rtol=1e-5, atol=1e-5), "mismatch vs reference"

    print("KERNEL_OK")
</pallas_src>

<mosaic_0001>
module attributes {stable_mosaic.version = 11 : i64} {
  func.func @_qkv_kernel(%arg0: i32, %arg1: memref<8x32xf32, #tpu.memory_space<vmem>>, %arg2: memref<32x96xf32, #tpu.memory_space<vmem>>, %arg3: memref<1x96xf32, #tpu.memory_space<vmem>>, %arg4: memref<8x32xf32, #tpu.memory_space<vmem>>, %arg5: memref<8x32xf32, #tpu.memory_space<vmem>>, %arg6: memref<8x32xf32, #tpu.memory_space<vmem>>) attributes {dimension_semantics = [#tpu.dimension_semantics<parallel>], iteration_bounds = array<i64: 2>, scalar_prefetch = 0 : i64, scratch_operands = 0 : i64, tpu.core_type = #tpu.core_type<tc>, window_params = [{transform_indices = @transform_0, window_bounds = array<i64: 8, 32>}, {pipeline_mode = #tpu.pipeline_mode<synchronous>, transform_indices = @transform_1, window_bounds = array<i64: 32, 96>}, {pipeline_mode = #tpu.pipeline_mode<synchronous>, transform_indices = @transform_2, window_bounds = array<i64: 1, 96>}, {transform_indices = @transform_3, window_bounds = array<i64: 8, 32>}, {transform_indices = @transform_4, window_bounds = array<i64: 8, 32>}, {transform_indices = @transform_5, window_bounds = array<i64: 8, 32>}]} {
    %c0 = arith.constant 0 : index
    %c0_0 = arith.constant 0 : index
    %0 = vector.load %arg1[%c0, %c0_0] : memref<8x32xf32, #tpu.memory_space<vmem>>, vector<8x32xf32>
    %c0_1 = arith.constant 0 : index
    %c0_2 = arith.constant 0 : index
    %1 = vector.load %arg2[%c0_1, %c0_2] : memref<32x96xf32, #tpu.memory_space<vmem>>, vector<32x96xf32>
    %cst = arith.constant dense<0.000000e+00> : vector<8x96xf32>
    %2 = tpu.matmul %0, %1, %cst {dimension_numbers = #tpu.dot_dimension_numbers<[1], [0], [0], [1], [0, 0, 1, 1], [], []>} : vector<8x32xf32>, vector<32x96xf32>, vector<8x96xf32> -> vector<8x96xf32>
    %c0_3 = arith.constant 0 : index
    %c0_4 = arith.constant 0 : index
    %3 = vector.load %arg3[%c0_3, %c0_4] : memref<1x96xf32, #tpu.memory_space<vmem>>, vector<1x96xf32>
    %4 = vector.broadcast %3 : vector<1x96xf32> to vector<8x96xf32>
    %5 = arith.addf %2, %4 : vector<8x96xf32>
    %6 = vector.extract_strided_slice %5 {offsets = [0, 0], sizes = [8, 32], strides = [1, 1]} : vector<8x96xf32> to vector<8x32xf32>
    %c0_5 = arith.constant 0 : index
    %c0_6 = arith.constant 0 : index
    %7 = vector.load %arg4[%c0_5, %c0_6] : memref<8x32xf32, #tpu.memory_space<vmem>>, vector<8x32xf32>
    tpu.vector_store %arg4[%c0_5, %c0_6], %6 {strides = array<i32>} : memref<8x32xf32, #tpu.memory_space<vmem>>, vector<8x32xf32>,
    %8 = vector.extract_strided_slice %5 {offsets = [0, 32], sizes = [8, 32], strides = [1, 1]} : vector<8x96xf32> to vector<8x32xf32>
    %c0_7 = arith.constant 0 : index
    %c0_8 = arith.constant 0 : index
    %9 = vector.load %arg5[%c0_7, %c0_8] : memref<8x32xf32, #tpu.memory_space<vmem>>, vector<8x32xf32>
    tpu.vector_store %arg5[%c0_7, %c0_8], %8 {strides = array<i32>} : memref<8x32xf32, #tpu.memory_space<vmem>>, vector<8x32xf32>,
    %10 = vector.extract_strided_slice %5 {offsets = [0, 64], sizes = [8, 32], strides = [1, 1]} : vector<8x96xf32> to vector<8x32xf32>
    %c0_9 = arith.constant 0 : index
    %c0_10 = arith.constant 0 : index
    %11 = vector.load %arg6[%c0_9, %c0_10] : memref<8x32xf32, #tpu.memory_space<vmem>>, vector<8x32xf32>
    tpu.vector_store %arg6[%c0_9, %c0_10], %10 {strides = array<i32>} : memref<8x32xf32, #tpu.memory_space<vmem>>, vector<8x32xf32>,
    return
  }
  func.func @transform_0(%arg0: i32) -> (i32, i32) {
    %c0_i32 = arith.constant 0 : i32
    %c0_i32_0 = arith.constant 0 : i32
    return %arg0, %c0_i32 : i32, i32
  }
  func.func @transform_1(%arg0: i32) -> (i32, i32) {
    %c0_i32 = arith.constant 0 : i32
    %c0_i32_0 = arith.constant 0 : i32
    %c0_i32_1 = arith.constant 0 : i32
    return %c0_i32, %c0_i32_0 : i32, i32
  }
  func.func @transform_2(%arg0: i32) -> (i32, i32) {
    %c0_i32 = arith.constant 0 : i32
    %c0_i32_0 = arith.constant 0 : i32
    %c0_i32_1 = arith.constant 0 : i32
    return %c0_i32, %c0_i32_0 : i32, i32
  }
  func.func @transform_3(%arg0: i32) -> (i32, i32) {
    %c0_i32 = arith.constant 0 : i32
    %c0_i32_0 = arith.constant 0 : i32
    return %arg0, %c0_i32 : i32, i32
  }
  func.func @transform_4(%arg0: i32) -> (i32, i32) {
    %c0_i32 = arith.constant 0 : i32
    %c0_i32_0 = arith.constant 0 : i32
    return %arg0, %c0_i32 : i32, i32
  }
  func.func @transform_5(%arg0: i32) -> (i32, i32) {
    %c0_i32 = arith.constant 0 : i32
    %c0_i32_0 = arith.constant 0 : i32
    return %arg0, %c0_i32 : i32, i32
  }
}

</mosaic_0001>

<llo_original>
// kernel: tpu_custom_call.1
$region0: #{tpu_custom_call.1}
  #allocation0 [shape = 'u32[]', space=smem, size = 0x4, offset = 0x4, fixed_abs, tag = 'smem constant byte address 0x4 - core index']
  #allocation1 [shape = 'u32[72,128]{1,0:T(1,128)}', space=vmem, size = 0x9000, scoped, tag = 'internal scratch']
  %s0 = inlined_call_operand.hbm [shape: f32[16,32], index: 0, kind: input, shape index: {}]
  %s1 = inlined_call_operand.hbm [shape: f32[32,96], index: 1, kind: input, shape index: {}]
  %s2 = inlined_call_operand.vmem [shape: f32[1,96], index: 2, kind: input, shape index: {}]
  %s3 = inlined_call_operand.hbm [shape: f32[16,32], index: 3, kind: output, shape index: {0}]
  %s4 = inlined_call_operand.hbm [shape: f32[16,32], index: 4, kind: output, shape index: {1}]
  %s5 = inlined_call_operand.hbm [shape: f32[16,32], index: 5, kind: output, shape index: {2}]
  %6 = xla_tuple %s3, %s4, %s5
  %s7 = sld [smem:[#allocation0]]
  $region69: #{tpu_custom_call.1} parent=0
    _
  %s9 = ssub.s32 1, %s7
  %s10 = scalar_select 0, %s9, %s7
  $region1: #{tpu_custom_call.1} parent=0
    #allocation2 [shape = 'u8[8192]{0}', space=vmem, size = 0x2000, scoped, tag = 'input window, operand 0']
    #allocation3 [shape = 's32[2]{0}', space=sflag, size = 0x8, scoped, tag = 'scoped memory for tpu_custom_call.1']
    #allocation4 [shape = 's32[2]{0}', space=sflag, size = 0x8, scoped, tag = 'scoped memory for tpu_custom_call.1']
    #allocation5 [shape = 'u8[16384]{0}', space=vmem, size = 0x4000, scoped, tag = 'input window, operand 1, single buffered']
    #allocation6 [shape = 's32[1]{0}', space=sflag, size = 0x4, scoped, tag = 'scoped memory for tpu_custom_call.1']
    #allocation7 [shape = 'u8[8192]{0}', space=vmem, size = 0x2000, scoped, tag = 'output window, operand 0']
    #allocation8 [shape = 'u8[8192]{0}', space=vmem, size = 0x2000, scoped, tag = 'output window, operand 1']
    #allocation9 [shape = 's32[2]{0}', space=sflag, size = 0x8, scoped, tag = 'scoped memory for tpu_custom_call.1']
    #allocation10 [shape = 'u8[8192]{0}', space=vmem, size = 0x2000, scoped, tag = 'output window, operand 2']
    %11 = vsyncpa [#allocation3], 0
    %s12 = scalar_lea.sflag [#allocation3], 1
    %13 = vsyncpa %s12, 0
    %14 = vsyncpa [#allocation6], 0
    %15 = vsyncpa [#allocation4], 0
    %s16 = scalar_lea.sflag [#allocation4], 1
    %17 = vsyncpa %s16, 0
    %18 = vsyncpa [#allocation9], 0
    %s19 = scalar_lea.sflag [#allocation9], 1
    %20 = vsyncpa %s19, 0
    loop: start=0, step=1, limit=4
    $region2: #{tpu_custom_call.1} parent=1 // loop_pre_header
      _
    $region3: #{tpu_custom_call.1} parent=1 // loop_header
      %s22 = sphi 0, %s26
      %p23 = scmp.ge.s32.totalorder %s22, 4
      %s32 = sphi 0, %s34
      %s35 = sphi 0, %s32
      %s36 = sphi 0, %s35
      %s52 = sphi 0, %s36
      %s56 = sphi 0, %s56
      %s58 = sphi 0, %s56
      %s59 = sphi 0, %s58
      %s73 = sphi 0, %s59
      %s77 = sphi 0, %s77
      %s79 = sphi 0, %s77
      %s80 = sphi 0, %s79
      %s94 = sphi 0, %s80
      %s100 = sphi 0, %s102
      %s103 = sphi 0, %s100
      %s104 = sphi 0, %s103
      %s120 = sphi 0, %s104
      %s126 = sphi 0, %s128
      %s129 = sphi 0, %s126
      %s130 = sphi 0, %s129
      %s146 = sphi 0, %s130
      %s152 = sphi 0, %s154
      %s155 = sphi 0, %s152
      %s156 = sphi 0, %s155
      %s172 = sphi 0, %s156
    $region4: #{tpu_custom_call.1} parent=1 // loop_header_branch
      %25 = sbr.rel (%p23) target = $region8
    $region5: #{tpu_custom_call.1} parent=1 // loop_body
      %s27 = ssub.s32 %s22, 1
      %s28 = ssub.s32 %s22, 2
      %s29 = sadd.s32 %s22, 1
      %s30 = ssub.s32 %s22, %s29
      %p31 = scmp.eq.s32.totalorder %s30, 0
      %s33 = sadd.s32 %s32, 1
      %s34 = scalar_select %p31, %s32, %s33
      %p37 = pneg %p31
      %p38 = scmp.eq.s32.totalorder %s22, 1
      %p39 = por %p37, %p38
      %p40 = scmp.ne.s32.totalorder %s32, %s35
      %p41 = scmp.eq.s32.totalorder %s22, 0
      %p42 = por %p40, %p41
      %p43 = scmp.ne.s32.totalorder %s32, %s35
      %p44 = scmp.eq.s32.totalorder %s27, 1
      %p45 = por %p43, %p44
      %p46 = scmp.ne.s32.totalorder %s35, %s36
      %p47 = scmp.eq.s32.totalorder %s27, 0
      %p48 = por %p46, %p47
      %p49 = scmp.ne.s32.totalorder %s35, %s36
      %p50 = scmp.eq.s32.totalorder %s28, 1
      %p51 = por %p49, %p50
      %p53 = scmp.ne.s32.totalorder %s36, %s52
      %p54 = scmp.eq.s32.totalorder %s28, 0
      %p55 = por %p53, %p54
      %s57 = sadd.s32 %s56, 1
      %p60 = scmp.eq.s32.totalorder %s22, 1
      %p61 = scmp.ne.s32.totalorder %s56, %s58
      %p62 = scmp.eq.s32.totalorder %s22, 0
      %p63 = por %p61, %p62
      %p64 = scmp.ne.s32.totalorder %s56, %s58
      %p65 = scmp.eq.s32.totalorder %s27, 1
      %p66 = por %p64, %p65
      %p67 = scmp.ne.s32.totalorder %s58, %s59
      %p68 = scmp.eq.s32.totalorder %s27, 0
      %p69 = por %p67, %p68
      %p70 = scmp.ne.s32.totalorder %s58, %s59
      %p71 = scmp.eq.s32.totalorder %s28, 1
      %p72 = por %p70, %p71
      %p74 = scmp.ne.s32.totalorder %s59, %s73
      %p75 = scmp.eq.s32.totalorder %s28, 0
      %p76 = por %p74, %p75
      %s78 = sadd.s32 %s77, 1
      %p81 = scmp.eq.s32.totalorder %s22, 1
      %p82 = scmp.ne.s32.totalorder %s77, %s79
      %p83 = scmp.eq.s32.totalorder %s22, 0
      %p84 = por %p82, %p83
      %p85 = scmp.ne.s32.totalorder %s77, %s79
      %p86 = scmp.eq.s32.totalorder %s27, 1
      %p87 = por %p85, %p86
      %p88 = scmp.ne.s32.totalorder %s79, %s80
      %p89 = scmp.eq.s32.totalorder %s27, 0
      %p90 = por %p88, %p89
      %p91 = scmp.ne.s32.totalorder %s79, %s80
      %p92 = scmp.eq.s32.totalorder %s28, 1
      %p93 = por %p91, %p92
      %p95 = scmp.ne.s32.totalorder %s80, %s94
      %p96 = scmp.eq.s32.totalorder %s28, 0
      %p97 = por %p95, %p96
      %s98 = ssub.s32 %s22, %s29
      %p99 = scmp.eq.s32.totalorder %s98, 0
      %s101 = sadd.s32 %s100, 1
      %s102 = scalar_select %p99, %s100, %s101
      %p105 = pneg %p99
      %p106 = scmp.eq.s32.totalorder %s22, 1
      %p107 = por %p105, %p106
      %p108 = scmp.ne.s32.totalorder %s100, %s103
      %p109 = scmp.eq.s32.totalorder %s22, 0
      %p110 = por %p108, %p109
      %p111 = scmp.ne.s32.totalorder %s100, %s103
      %p112 = scmp.eq.s32.totalorder %s27, 1
      %p113 = por %p111, %p112
      %p114 = scmp.ne.s32.totalorder %s103, %s104
      %p115 = scmp.eq.s32.totalorder %s27, 0
      %p116 = por %p114, %p115
      %p117 = scmp.ne.s32.totalorder %s103, %s104
      %p118 = scmp.eq.s32.totalorder %s28, 1
      %p119 = por %p117, %p118
      %p121 = scmp.ne.s32.totalorder %s104, %s120
      %p122 = scmp.eq.s32.totalorder %s28, 0
      %p123 = por %p121, %p122
      %s124 = ssub.s32 %s22, %s29
      %p125 = scmp.eq.s32.totalorder %s124, 0
      %s127 = sadd.s32 %s126, 1
      %s128 = scalar_select %p125, %s126, %s127
      %p131 = pneg %p125
      %p132 = scmp.eq.s32.totalorder %s22, 1
      %p133 = por %p131, %p132
      %p134 = scmp.ne.s32.totalorder %s126, %s129
      %p135 = scmp.eq.s32.totalorder %s22, 0
      %p136 = por %p134, %p135
      %p137 = scmp.ne.s32.totalorder %s126, %s129
      %p138 = scmp.eq.s32.totalorder %s27, 1
      %p139 = por %p137, %p138
      %p140 = scmp.ne.s32.totalorder %s129, %s130
      %p141 = scmp.eq.s32.totalorder %s27, 0
      %p142 = por %p140, %p141
      %p143 = scmp.ne.s32.totalorder %s129, %s130
      %p144 = scmp.eq.s32.totalorder %s28, 1
      %p145 = por %p143, %p144
      %p147 = scmp.ne.s32.totalorder %s130, %s146
      %p148 = scmp.eq.s32.totalorder %s28, 0
      %p149 = por %p147, %p148
      %s150 = ssub.s32 %s22, %s29
      %p151 = scmp.eq.s32.totalorder %s150, 0
      %s153 = sadd.s32 %s152, 1
      %s154 = scalar_select %p151, %s152, %s153
      %p157 = pneg %p151
      %p158 = scmp.eq.s32.totalorder %s22, 1
      %p159 = por %p157, %p158
      %p160 = scmp.ne.s32.totalorder %s152, %s155
      %p161 = scmp.eq.s32.totalorder %s22, 0
      %p162 = por %p160, %p161
      %p163 = scmp.ne.s32.totalorder %s152, %s155
      %p164 = scmp.eq.s32.totalorder %s27, 1
      %p165 = por %p163, %p164
      %p166 = scmp.ne.s32.totalorder %s155, %s156
      %p167 = scmp.eq.s32.totalorder %s27, 0
      %p168 = por %p166, %p167
      %p169 = scmp.ne.s32.totalorder %s155, %s156
      %p170 = scmp.eq.s32.totalorder %s28, 1
      %p171 = por %p169, %p170
      %p173 = scmp.ne.s32.totalorder %s156, %s172
      %p174 = scmp.eq.s32.totalorder %s28, 0
      %p175 = por %p173, %p174
      %p176 = scmp.le.s32.totalorder 1, %s22
      %p177 = scmp.lt.s32.totalorder %s22, 3
      %p178 = pnand %p176, %p177
      %p179 = pneg %p178
      // Predicated region
      $region9: #{tpu_custom_call.1} parent=5 // pred_check
        _
      $region10: #{tpu_custom_call.1} parent=5 // pred_check_branch
        %181 = sbr.rel (%p178) target = $region12
      $region11: #{tpu_custom_call.1} parent=5 // pred_region
        %s182 = ssub.s32 %s22, 1
        // Predicated region
        $region13: #{tpu_custom_call.1} parent=11 // pred_check
          %p183 = pneg %p69
        $region14: #{tpu_custom_call.1} parent=11 // pred_check_branch
          %185 = sbr.rel (%p183) target = $region16
        $region15: #{tpu_custom_call.1} parent=11 // pred_region
          %187 = vsyncadd [#allocation6], 0
          %s188 = sshll.u32 %s1, 4
          %s189 = int_to_ptr.hbm [resolvable:$true] %s188
          %s190 = sshll.u32 [#allocation5], 4
          %s191 = int_to_ptr.vmem [resolvable:$true] %s190
          %196 = dma.hbm_to_vmem [thread:$0]  %s189, 512, %s191, [#allocation6], 128, 128, 8
        $region16: #{tpu_custom_call.1} parent=11 // pred_fallthru
          _
        // Predicated region
        $region17: #{tpu_custom_call.1} parent=11 // pred_check
          %p197 = pneg %p90
        $region18: #{tpu_custom_call.1} parent=11 // pred_check_branch
          %199 = sbr.rel (%p197) target = $region20
        $region19: #{tpu_custom_call.1} parent=11 // pred_region
          _
        $region20: #{tpu_custom_call.1} parent=11 // pred_fallthru
          _
      $region12: #{tpu_custom_call.1} parent=5 // pred_fallthru
        _
      %p200 = scmp.lt.s32.totalorder %s22, 2
      // Predicated region
      $region21: #{tpu_custom_call.1} parent=5 // pred_check
        %p201 = pneg %p200
      $region22: #{tpu_custom_call.1} parent=5 // pred_check_branch
        %203 = sbr.rel (%p201) target = $region24
      $region23: #{tpu_custom_call.1} parent=5 // pred_region
        // Predicated region
        $region25: #{tpu_custom_call.1} parent=23 // pred_check
          %p204 = pneg %p42
        $region26: #{tpu_custom_call.1} parent=23 // pred_check_branch
          %206 = sbr.rel (%p204) target = $region28
        $region27: #{tpu_custom_call.1} parent=23 // pred_region
          %s207 = sand.u32 %s32, 1
          %s208 = scalar_lea.sflag [#allocation3], %s207
          %s209 = sand.u32 %s32, 1
          %s210 = smul.addr %s209, 8
          %s211 = scalar_lea.vmem [#allocation2], %s210
          %213 = vsyncadd %s208, 0
          %s214 = smul.addr %s22, 8
          %s215 = scalar_lea.hbm %s0, %s214
          %s217 = sshll.u32 %s215, 4
          %s218 = int_to_ptr.hbm [resolvable:$true] %s217
          %s219 = sshll.u32 %s211, 4
          %s220 = int_to_ptr.vmem [resolvable:$true] %s219
          %222 = dma.hbm_to_vmem [thread:$0]  %s218, 128, %s220, %s208
        $region28: #{tpu_custom_call.1} parent=23 // pred_fallthru
          _
      $region24: #{tpu_custom_call.1} parent=5 // pred_fallthru
        _
      %p223 = scmp.le.s32.totalorder 1, %s22
      %p224 = scmp.lt.s32.totalorder %s22, 3
      %p225 = pnand %p223, %p224
      %p226 = pneg %p225
      // Predicated region
      $region29: #{tpu_custom_call.1} parent=5 // pred_check
        _
      $region30: #{tpu_custom_call.1} parent=5 // pred_check_branch
        %228 = sbr.rel (%p225) target = $region32
      $region31: #{tpu_custom_call.1} parent=5 // pred_region
        %s229 = ssub.s32 %s22, 1
        %s230 = sand.u32 %s35, 1
        %s231 = scalar_lea.sflag [#allocation3], %s230
        %s232 = sand.u32 %s35, 1
        %s233 = smul.addr %s232, 8
        %s234 = scalar_lea.vmem [#allocation2], %s233
        // Predicated region
        $region33: #{tpu_custom_call.1} parent=31 // pred_check
          %p235 = pneg %p48
        $region34: #{tpu_custom_call.1} parent=31 // pred_check_branch
          %237 = sbr.rel (%p235) target = $region36
        $region35: #{tpu_custom_call.1} parent=31 // pred_region
          %239 = dma.done %s231, 128
        $region36: #{tpu_custom_call.1} parent=31 // pred_fallthru
          _
        // Predicated region
        $region37: #{tpu_custom_call.1} parent=31 // pred_check
          %p240 = pneg %p69
        $region38: #{tpu_custom_call.1} parent=31 // pred_check_branch
          %242 = sbr.rel (%p240) target = $region40
        $region39: #{tpu_custom_call.1} parent=31 // pred_region
          %244 = dma.done [#allocation6], 512
        $region40: #{tpu_custom_call.1} parent=31 // pred_fallthru
          _
        %s245 = sand.u32 %s35, 1
        %s246 = scalar_lea.sflag [#allocation3], %s245
        %s247 = sand.u32 %s35, 1
        %s248 = smul.addr %s247, 8
        %s249 = scalar_lea.vmem [#allocation2], %s248
        %p250 = pneg %p48
        %p251 = pneg %p45
        %p252 = pneg %p69
        %p253 = pneg %p66
        %p254 = pneg %p90
        %p255 = pneg %p87
        %p256 = pneg %p116
        %p257 = pneg %p113
        %s258 = sand.u32 %s103, 1
        %s259 = scalar_lea.sflag [#allocation4], %s258
        %s260 = sand.u32 %s103, 1
        %s261 = smul.addr %s260, 8
        %s262 = scalar_lea.vmem [#allocation7], %s261
        %p263 = pneg %p142
        %p264 = pneg %p139
        %s265 = sand.u32 %s27, 1
        %s266 = scalar_lea.sflag [#allocation9], %s265
        %s267 = sand.u32 %s129, 1
        %s268 = smul.addr %s267, 8
        %s269 = scalar_lea.vmem [#allocation8], %s268
        %p270 = pneg %p168
        %p271 = pneg %p165
        %s272 = sand.u32 %s27, 1
        %s273 = scalar_lea.sflag [#allocation9], %s272
        %s274 = sand.u32 %s155, 1
        %s275 = smul.addr %s274, 8
        %s276 = scalar_lea.vmem [#allocation10], %s275
        %v277 = vld [vmem:[%s234] sm:$0xff]
        %v278 = vld [vmem:[#allocation5] sm:$0xff]
        %v279 = vld [vmem:[#allocation5 + $0x8] sm:$0xff]
        %v280 = vld [vmem:[#allocation5 + $0x10] sm:$0xff]
        %v281 = vld [vmem:[#allocation5 + $0x18] sm:$0xff]
        %v282 = vld [vmem:[%s2] sm:$0x1]
        %v284 = vperm.slane %v282, 0
        %vm286 = vcmask 261120
        %v288 = vsel %vm286, %v277, 0
        %290 = vmatpush.msra.mxu0 0.0
        %291 = vmatpush.msra.mxu0 0.0
        %292 = vmatpush.msra.mxu0 0.0
        %293 = vmatpush.msra.mxu0 0.0
        %294 = vmatpush.msra.mxu0 0.0
        %295 = vmatpush.msra.mxu0 0.0
        %296 = vmatpush.msra.mxu0 0.0
        %297 = vmatpush.msra.mxu0 0.0
        %298 = vmatpush.msra.mxu0 0.0
        %299 = vmatpush.msra.mxu0 0.0
        %300 = vmatpush.msra.mxu0 0.0
        %301 = vmatpush.msra.mxu0 0.0
        %302 = vmatpush.msra.mxu0 %v281
        %303 = vmatpush.msra.mxu0 %v280
        %304 = vmatpush.msra.mxu0 %v279
        %305 = vmatpush.msra.mxu0 %v278
        %306 = vmatmul.f32.gmra.mxu0 %v288
        %v307 = vpop.f32.mrf.mxu0
        %v308 = vadd.f32 %v284, %v307
        %309 = vdwg.mxu0
        %310 = vst.msk [vmem:[%s262] sm:$0xff] %vm286, %v308
        %312 = vrot.lane.b32.xlu0 %v308, 96
        %v313 = vpop.permute.xlu0 %312
        %315 = vst.msk [vmem:[%s269] sm:$0xff] %vm286, %v313
        %316 = vrot.lane.b32.xlu0 %v308, 64
        %v317 = vpop.permute.xlu0 %316
        %319 = vst.msk [vmem:[%s276] sm:$0xff] %vm286, %v317
        %s320 = sand.u32 %s103, 1
        %s321 = scalar_lea.sflag [#allocation4], %s320
        %s322 = sand.u32 %s103, 1
        %s323 = smul.addr %s322, 8
        %s324 = scalar_lea.vmem [#allocation7], %s323
        %s325 = sand.u32 %s27, 1
        %s326 = scalar_lea.sflag [#allocation9], %s325
        %s327 = sand.u32 %s129, 1
        %s328 = smul.addr %s327, 8
        %s329 = scalar_lea.vmem [#allocation8], %s328
        %s330 = sand.u32 %s27, 1
        %s331 = scalar_lea.sflag [#allocation9], %s330
        %s332 = sand.u32 %s155, 1
        %s333 = smul.addr %s332, 8
        %s334 = scalar_lea.vmem [#allocation10], %s333
        // Predicated region
        $region41: #{tpu_custom_call.1} parent=31 // pred_check
          %p335 = pneg %p113
        $region42: #{tpu_custom_call.1} parent=31 // pred_check_branch
          %337 = sbr.rel (%p335) target = $region44
        $region43: #{tpu_custom_call.1} parent=31 // pred_region
          %339 = vsyncadd %s321, 0
          %s340 = smul.addr %s27, 8
          %s341 = scalar_lea.hbm %s3, %s340
          %s343 = sshll.u32 %s324, 4
          %s344 = int_to_ptr.vmem [resolvable:$true] %s343
          %s345 = sshll.u32 %s341, 4
          %s346 = int_to_ptr.hbm [resolvable:$true] %s345
          %348 = dma.vmem_to_hbm [thread:$0]  %s344, 128, %s346, %s321
        $region44: #{tpu_custom_call.1} parent=31 // pred_fallthru
          _
        // Predicated region
        $region45: #{tpu_custom_call.1} parent=31 // pred_check
          %p349 = pneg %p139
        $region46: #{tpu_custom_call.1} parent=31 // pred_check_branch
          %351 = sbr.rel (%p349) target = $region48
        $region47: #{tpu_custom_call.1} parent=31 // pred_region
          %353 = vsyncadd %s326, 0
          %s354 = smul.addr %s27, 8
          %s355 = scalar_lea.hbm %s4, %s354
          %s357 = sshll.u32 %s329, 4
          %s358 = int_to_ptr.vmem [resolvable:$true] %s357
          %s359 = sshll.u32 %s355, 4
          %s360 = int_to_ptr.hbm [resolvable:$true] %s359
          %362 = dma.vmem_to_hbm [thread:$0]  %s358, 128, %s360, %s326
        $region48: #{tpu_custom_call.1} parent=31 // pred_fallthru
          _
        // Predicated region
        $region49: #{tpu_custom_call.1} parent=31 // pred_check
          %p363 = pneg %p165
        $region50: #{tpu_custom_call.1} parent=31 // pred_check_branch
          %365 = sbr.rel (%p363) target = $region52
        $region51: #{tpu_custom_call.1} parent=31 // pred_region
          %367 = vsyncadd %s331, 0
          %s368 = smul.addr %s27, 8
          %s369 = scalar_lea.hbm %s5, %s368
          %s371 = sshll.u32 %s334, 4
          %s372 = int_to_ptr.vmem [resolvable:$true] %s371
          %s373 = sshll.u32 %s369, 4
          %s374 = int_to_ptr.hbm [resolvable:$true] %s373
          %376 = dma.vmem_to_hbm [thread:$0]  %s372, 128, %s374, %s331
        $region52: #{tpu_custom_call.1} parent=31 // pred_fallthru
          _
      $region32: #{tpu_custom_call.1} parent=5 // pred_fallthru
        _
      %p377 = scmp.le.s32.totalorder 2, %s22
      // Predicated region
      $region53: #{tpu_custom_call.1} parent=5 // pred_check
        %p378 = pneg %p377
      $region54: #{tpu_custom_call.1} parent=5 // pred_check_branch
        %380 = sbr.rel (%p378) target = $region56
      $region55: #{tpu_custom_call.1} parent=5 // pred_region
        %s381 = ssub.s32 %s22, 2
        // Predicated region
        $region57: #{tpu_custom_call.1} parent=55 // pred_check
          %p382 = pneg %p119
        $region58: #{tpu_custom_call.1} parent=55 // pred_check_branch
          %384 = sbr.rel (%p382) target = $region60
        $region59: #{tpu_custom_call.1} parent=55 // pred_region
          %s385 = sand.u32 %s104, 1
          %s386 = scalar_lea.sflag [#allocation4], %s385
          %s387 = sand.u32 %s104, 1
          %s388 = smul.addr %s387, 8
          %s389 = scalar_lea.vmem [#allocation7], %s388
          %391 = dma.done %s386, 128
        $region60: #{tpu_custom_call.1} parent=55 // pred_fallthru
          _
        // Predicated region
        $region61: #{tpu_custom_call.1} parent=55 // pred_check
          %p392 = pneg %p145
        $region62: #{tpu_custom_call.1} parent=55 // pred_check_branch
          %394 = sbr.rel (%p392) target = $region64
        $region63: #{tpu_custom_call.1} parent=55 // pred_region
          %s395 = sand.u32 %s28, 1
          %s396 = scalar_lea.sflag [#allocation9], %s395
          %s397 = sand.u32 %s130, 1
          %s398 = smul.addr %s397, 8
          %s399 = scalar_lea.vmem [#allocation8], %s398
          %401 = dma.done %s396, 128
        $region64: #{tpu_custom_call.1} parent=55 // pred_fallthru
          _
        // Predicated region
        $region65: #{tpu_custom_call.1} parent=55 // pred_check
          %p402 = pneg %p171
        $region66: #{tpu_custom_call.1} parent=55 // pred_check_branch
          %404 = sbr.rel (%p402) target = $region68
        $region67: #{tpu_custom_call.1} parent=55 // pred_region
          %s405 = sand.u32 %s28, 1
          %s406 = scalar_lea.sflag [#allocation9], %s405
          %s407 = sand.u32 %s156, 1
          %s408 = smul.addr %s407, 8
          %s409 = scalar_lea.vmem [#allocation10], %s408
          %411 = dma.done %s406, 128
        $region68: #{tpu_custom_call.1} parent=55 // pred_fallthru
          _
      $region56: #{tpu_custom_call.1} parent=5 // pred_fallthru
        _
    $region6: #{tpu_custom_call.1} parent=1 // loop_footer
      %s26 = sadd.s32 1, %s22
    $region7: #{tpu_custom_call.1} parent=1 // loop_footer_branch
      %21 = sbr.rel target = $region3
    $region8: #{tpu_custom_call.1} parent=1 // loop_exit
      _
    %412 = vsyncpa [#allocation3], 1
    %s413 = scalar_lea.sflag [#allocation3], 1
    %414 = vsyncpa %s413, 1
    %415 = vsyncpa [#allocation6], 1
    %416 = vsyncpa [#allocation4], 1
    %s417 = scalar_lea.sflag [#allocation4], 1
    %418 = vsyncpa %s417, 1
    %419 = vsyncpa [#allocation9], 1
    %s420 = scalar_lea.sflag [#allocation9], 1
    %421 = vsyncpa %s420, 1

</llo_original>
